<compile_context>
chip_gen: v5e
topology: v5e:2x2
jax: 0.10.0
libtpu: 0.0.40
codegen_flags: <defaults>
</compile_context>

<pallas_src>
import functools

import jax
import jax.numpy as jnp
from jax.experimental import pallas as pl
from jax.experimental.pallas import tpu as pltpu


# ---------------------------------------------------------------------------
# Fused kernel: patch-matmul + train-mode BatchNorm + ReLU.
# Grid (j, m, k) = (channel strip, M tile, K tile); j "parallel", m/k "arbitrary".
# Output block (M, tn) is resident across m and k (index_map uses only j).
# ---------------------------------------------------------------------------
def _conv_bn_relu_kernel(x_ref, w_ref, g_ref, b_ref, o_ref, *, eps, tm):
    m = pl.program_id(1)
    k = pl.program_id(2)
    last_m = pl.num_programs(1) - 1
    last_k = pl.num_programs(2) - 1

    # Partial product for this (m, k) tile; bf16 x bf16 -> f32 on the MXU.
    prod = jnp.dot(x_ref[...], w_ref[...], preferred_element_type=jnp.float32)

    row = pl.multiple_of(m * tm, tm)

    @pl.when(k == 0)
    def _():
        o_ref[pl.ds(row, tm), :] = prod            # first K step: overwrite

    @pl.when(k != 0)
    def _():
        o_ref[pl.ds(row, tm), :] += prod           # later K steps: accumulate

    # Epilogue: once every M row of this channel strip has been accumulated,
    # compute exact batch statistics over all M rows (resident in VMEM) and
    # apply BN folded into one scale/shift, then ReLU, in place.
    @pl.when((m == last_m) & (k == last_k))
    def _():
        y = o_ref[...]                                           # [M, tn] f32
        mean = jnp.mean(y, axis=0, keepdims=True)                # [1, tn]
        var = jnp.mean(jnp.square(y - mean), axis=0, keepdims=True)
        s = jax.lax.rsqrt(var + eps) * g_ref[...]                # [1, tn]
        t = b_ref[...] - mean * s                                # [1, tn]
        o_ref[...] = jnp.maximum(y * s + t, 0.0)


# ---------------------------------------------------------------------------
# Tile / VMEM-budget helpers.
# ---------------------------------------------------------------------------
def _divisor_tile(dim, cap, quantum):
    """Largest t <= cap with dim % t == 0 and t a multiple of `quantum`.
    Falls back to the full dim (always a legal block) if none exists."""
    if dim <= cap:
        return dim
    t = (cap // quantum) * quantum
    while t >= quantum:
        if dim % t == 0:
            return t
        t -= quantum
    return dim


def _vmem_budget_bytes():
    """Generation-aware soft VMEM budget (headroom below physical VMEM)."""
    try:
        cap = pltpu.get_tpu_info().vmem_capacity_bytes
    except Exception:
        cap = 64 * 1024 * 1024        # v7x per-core physical (smallest case)
    return int(cap * 0.7)


def _fused_conv_bn_relu(patches, w_flat, gamma, beta, *, eps=1e-5):
    """patches: [M, K] bf16, w_flat: [K, D] bf16, gamma/beta: [1, D] f32."""
    M, K = patches.shape
    _, D = w_flat.shape

    # Lane-dense 128-wide channel strips (right on all generations; wider buys
    # nothing on v5e and only shrinks the megacore-parallel j axis).
    tn = _divisor_tile(D, 128, 128)
    # Large contraction tiles; K = Cin*p*p = 64 here -> a single k step.
    tk = _divisor_tile(K, 512, 128)
    # M tiles: multiple of 8 sublanes, capped so the grid has a few pipeline
    # steps to hide the patches DMA (the dominant HBM stream).
    tm_cap = min(256, max(8, M // 4)) if M >= 32 else M
    tm = _divisor_tile(M, tm_cap, 8)

    budget = _vmem_budget_bytes()
    isz = patches.dtype.itemsize

    def tile_bytes(tm_, tk_):
        tk_pad = -(-tk_ // 128) * 128          # lane padding in VMEM
        tn_pad = -(-tn // 128) * 128
        return (2 * tm_ * tk_pad * isz         # patches, double-buffered
                + 2 * tk_ * tn_pad * isz       # weights, double-buffered
                + 4 * 8 * tn_pad * 4)          # gamma/beta (sublane padded)

    resident = M * (-(-tn // 128) * 128) * 4   # resident f32 output strip
    assert resident + tile_bytes(8, 128) <= budget, (
        "resident (M, tn) output does not fit VMEM; two-pass BN path needed "
        "(see TODO(synk) above)")

    while resident + tile_bytes(tm, tk) > budget and tm > 8:
        tm = _divisor_tile(M, max(8, tm // 2), 8)
    while resident + tile_bytes(tm, tk) > budget and tk > 128:
        tk = _divisor_tile(K, max(128, tk // 2), 128)

    grid = (D // tn, M // tm, K // tk)

    required = resident + tile_bytes(tm, tk)
    cp_kwargs = dict(dimension_semantics=("parallel", "arbitrary", "arbitrary"))
    if required > (12 << 20):                  # may exceed default scoped VMEM
        cp_kwargs["vmem_limit_bytes"] = int(
            min(budget, required * 5 // 4 + (2 << 20)))

    return pl.pallas_call(
        functools.partial(_conv_bn_relu_kernel, eps=eps, tm=tm),
        out_shape=jax.ShapeDtypeStruct((M, D), jnp.float32),
        grid_spec=pltpu.PrefetchScalarGridSpec(
            num_scalar_prefetch=0,
            grid=grid,
            in_specs=[
                pl.BlockSpec((tm, tk), lambda j, m, k: (m, k)),   # patches
                pl.BlockSpec((tk, tn), lambda j, m, k: (k, j)),   # weights
                pl.BlockSpec((1, tn), lambda j, m, k: (0, j)),    # gamma
                pl.BlockSpec((1, tn), lambda j, m, k: (0, j)),    # beta
            ],
            # Resident across m and k: index_map depends only on j.
            out_specs=pl.BlockSpec((M, tn), lambda j, m, k: (0, j)),
        ),
        compiler_params=pltpu.CompilerParams(**cp_kwargs),
    )(patches, w_flat, gamma, beta)


# ---------------------------------------------------------------------------
# NaiveConv forward (glue in plain JAX, compute in the fused kernel).
# ---------------------------------------------------------------------------
def naive_conv_forward(x, params, patch_size, eps=1e-5):
    """x: [N, Cin, H, W] (NCHW). Returns [N, out_dim, H//p, W//p] (NCHW)."""
    w = params["w"]                                  # [D, Cin, p, p]
    gamma, beta = params["gamma"], params["beta"]    # [D], [D]
    N, C, H, W = x.shape
    p = patch_size
    assert H % p == 0 and W % p == 0
    Ho, Wo = H // p, W // p
    D = w.shape[0]
    K = C * p * p
    M = N * Ho * Wo

    # Non-overlapping patch extraction; K flattened in (c, kh, kw) order to
    # match the OIHW weight layout.  (Layout plumbing; an NHWC pipeline could
    # flatten K as (kh, kw, c) and avoid this transpose.)
    patches = x.reshape(N, C, Ho, p, Wo, p)
    patches = patches.transpose(0, 2, 4, 1, 3, 5).reshape(M, K)
    w_flat = w.reshape(D, K).T                       # [K, D]

    # Conv bias intentionally not passed: train-mode BN's batch-mean
    # subtraction cancels it exactly.  bf16 operands halve DMA bytes and run
    # the MXU at full rate; the kernel accumulates in f32.
    y = _fused_conv_bn_relu(
        patches.astype(jnp.bfloat16),
        w_flat.astype(jnp.bfloat16),
        gamma.reshape(1, D).astype(jnp.float32),
        beta.reshape(1, D).astype(jnp.float32),
        eps=eps,
    )

    # Kernel emits NHWC-flat [M, D]; transpose to NCHW only because the
    # PyTorch module's contract is NCHW (NHWC consumers should skip this).
    return y.reshape(N, Ho, Wo, D).transpose(0, 3, 1, 2)


# ---------------------------------------------------------------------------
# Pure-JAX reference for correctness checking (faithful to the PyTorch module,
# including the conv bias).
# ---------------------------------------------------------------------------
def _reference(x, params, patch_size, eps=1e-5):
    w, b = params["w"], params["b"]
    gamma, beta = params["gamma"], params["beta"]
    p = patch_size
    y = jax.lax.conv_general_dilated(
        x, w, window_strides=(p, p), padding="VALID",
        dimension_numbers=("NCHW", "OIHW", "NCHW"))
    y = y + b[None, :, None, None]
    mean = y.mean(axis=(0, 2, 3), keepdims=True)
    var = jnp.square(y - mean).mean(axis=(0, 2, 3), keepdims=True)
    yn = (y - mean) * jax.lax.rsqrt(var + eps)
    yn = yn * gamma[None, :, None, None] + beta[None, :, None, None]
    return jnp.maximum(yn, 0.0)


if __name__ == "__main__":
    # Module config: NaiveConv(in_chans=4, out_dim=128, patch_size=4)
    in_chans, out_dim, patch_size = 4, 128, 4
    N, H, W = 2, 32, 32

    key = jax.random.PRNGKey(0)
    kx, kw, kb, kg, kbeta = jax.random.split(key, 5)

    x = jax.random.normal(kx, (N, in_chans, H, W), dtype=jnp.float32)

    # Deterministic parameter init (shapes match nn.Conv2d / nn.BatchNorm2d).
    fan_in = in_chans * patch_size * patch_size
    params = {
        "w": jax.random.uniform(kw, (out_dim, in_chans, patch_size, patch_size),
                                jnp.float32, -1.0, 1.0) / jnp.sqrt(fan_in),
        "b": jax.random.uniform(kb, (out_dim,), jnp.float32, -1.0, 1.0)
             / jnp.sqrt(fan_in),
        "gamma": 1.0 + 0.1 * jax.random.normal(kg, (out_dim,), jnp.float32),
        "beta": 0.1 * jax.random.normal(kbeta, (out_dim,), jnp.float32),
    }

    out = naive_conv_forward(x, params, patch_size)
    out = jax.block_until_ready(out)

    ref = _reference(x, params, patch_size)
    assert out.shape == (N, out_dim, H // patch_size, W // patch_size), out.shape
    # bf16 operands (f32 accumulation) -> looser tolerance vs. f32 reference.
    assert jnp.allclose(out, ref, atol=2e-2, rtol=2e-2), \
        float(jnp.max(jnp.abs(out - ref)))

    print("KERNEL_OK")
</pallas_src>

<mosaic_0001>
module attributes {stable_mosaic.version = 11 : i64} {
  func.func @_conv_bn_relu_kernel(%arg0: i32, %arg1: i32, %arg2: i32, %arg3: memref<32x64xbf16, #tpu.memory_space<vmem>>, %arg4: memref<64x128xbf16, #tpu.memory_space<vmem>>, %arg5: memref<1x128xf32, #tpu.memory_space<vmem>>, %arg6: memref<1x128xf32, #tpu.memory_space<vmem>>, %arg7: memref<128x128xf32, #tpu.memory_space<vmem>>) attributes {dimension_semantics = [#tpu.dimension_semantics<parallel>, #tpu.dimension_semantics<arbitrary>, #tpu.dimension_semantics<arbitrary>], iteration_bounds = array<i64: 1, 4, 1>, scalar_prefetch = 0 : i64, scratch_operands = 0 : i64, tpu.core_type = #tpu.core_type<tc>, window_params = [{transform_indices = @transform_0, window_bounds = array<i64: 32, 64>}, {transform_indices = @transform_1, window_bounds = array<i64: 64, 128>}, {transform_indices = @transform_2, window_bounds = array<i64: 1, 128>}, {transform_indices = @transform_3, window_bounds = array<i64: 1, 128>}, {transform_indices = @transform_4, window_bounds = array<i64: 128, 128>}]} {
    %c0 = arith.constant 0 : index
    %c0_0 = arith.constant 0 : index
    %0 = vector.load %arg3[%c0, %c0_0] : memref<32x64xbf16, #tpu.memory_space<vmem>>, vector<32x64xbf16>
    %c0_1 = arith.constant 0 : index
    %c0_2 = arith.constant 0 : index
    %1 = vector.load %arg4[%c0_1, %c0_2] : memref<64x128xbf16, #tpu.memory_space<vmem>>, vector<64x128xbf16>
    %cst = arith.constant dense<0.000000e+00> : vector<32x128xf32>
    %2 = tpu.matmul %0, %1, %cst {dimension_numbers = #tpu.dot_dimension_numbers<[1], [0], [0], [1], [0, 0, 1, 1], [], []>} : vector<32x64xbf16>, vector<64x128xbf16>, vector<32x128xf32> -> vector<32x128xf32>
    %c32_i32 = arith.constant 32 : i32
    %3 = arith.muli %arg1, %c32_i32 : i32
    %4 = tpu.assume_multiple %3, 32 : i32
    %c0_i32 = arith.constant 0 : i32
    %5 = arith.cmpi eq, %arg2, %c0_i32 : i32
    %6 = arith.extui %5 : i1 to i32
    %c0_i32_3 = arith.constant 0 : i32
    %7 = arith.cmpi ne, %6, %c0_i32_3 : i32
    scf.if %7 {
      %16 = arith.index_cast %4 : i32 to index
      %c0_8 = arith.constant 0 : index
      %17 = vector.load %arg7[%16, %c0_8] : memref<128x128xf32, #tpu.memory_space<vmem>>, vector<32x128xf32>
      tpu.vector_store %arg7[%16, %c0_8], %2 {strides = array<i32>} : memref<128x128xf32, #tpu.memory_space<vmem>>, vector<32x128xf32>,
    } else {
    }
    %c0_i32_4 = arith.constant 0 : i32
    %8 = arith.cmpi ne, %arg2, %c0_i32_4 : i32
    %9 = arith.extui %8 : i1 to i32
    %c0_i32_5 = arith.constant 0 : i32
    %10 = arith.cmpi ne, %9, %c0_i32_5 : i32
    scf.if %10 {
      %16 = arith.index_cast %4 : i32 to index
      %c0_8 = arith.constant 0 : index
      %17 = vector.load %arg7[%16, %c0_8] : memref<128x128xf32, #tpu.memory_space<vmem>>, vector<32x128xf32>
      %18 = arith.addf %17, %2 : vector<32x128xf32>
      %19 = arith.index_cast %4 : i32 to index
      %c0_9 = arith.constant 0 : index
      %20 = vector.load %arg7[%19, %c0_9] : memref<128x128xf32, #tpu.memory_space<vmem>>, vector<32x128xf32>
      tpu.vector_store %arg7[%19, %c0_9], %18 {strides = array<i32>} : memref<128x128xf32, #tpu.memory_space<vmem>>, vector<32x128xf32>,
    } else {
    }
    %c3_i32 = arith.constant 3 : i32
    %11 = arith.cmpi eq, %arg1, %c3_i32 : i32
    %c0_i32_6 = arith.constant 0 : i32
    %12 = arith.cmpi eq, %arg2, %c0_i32_6 : i32
    %13 = arith.andi %11, %12 : i1
    %14 = arith.extui %13 : i1 to i32
    %c0_i32_7 = arith.constant 0 : i32
    %15 = arith.cmpi ne, %14, %c0_i32_7 : i32
    scf.if %15 {
      %c0_8 = arith.constant 0 : index
      %c0_9 = arith.constant 0 : index
      %16 = vector.load %arg7[%c0_8, %c0_9] : memref<128x128xf32, #tpu.memory_space<vmem>>, vector<128x128xf32>
      %cst_10 = arith.constant dense<0.000000e+00> : vector<128xf32>
      %17 = vector.multi_reduction <add>, %16, %cst_10 [0] : vector<128x128xf32> to vector<128xf32>
      %18 = vector.shape_cast %17 : vector<128xf32> to vector<1x128xf32>
      %cst_11 = arith.constant 1.280000e+02 : f32
      %19 = vector.broadcast %cst_11 : f32 to vector<1x128xf32>
      %20 = arith.divf %18, %19 : vector<1x128xf32>
      %21 = vector.broadcast %20 : vector<1x128xf32> to vector<128x128xf32>
      %22 = arith.subf %16, %21 : vector<128x128xf32>
      %23 = arith.mulf %22, %22 : vector<128x128xf32>
      %cst_12 = arith.constant dense<0.000000e+00> : vector<128xf32>
      %24 = vector.multi_reduction <add>, %23, %cst_12 [0] : vector<128x128xf32> to vector<128xf32>
      %25 = vector.shape_cast %24 : vector<128xf32> to vector<1x128xf32>
      %cst_13 = arith.constant 1.280000e+02 : f32
      %26 = vector.broadcast %cst_13 : f32 to vector<1x128xf32>
      %27 = arith.divf %25, %26 : vector<1x128xf32>
      %cst_14 = arith.constant 9.99999974E-6 : f32
      %28 = vector.broadcast %cst_14 : f32 to vector<1x128xf32>
      %29 = arith.addf %27, %28 : vector<1x128xf32>
      %30 = math.rsqrt %29 : vector<1x128xf32>
      %c0_15 = arith.constant 0 : index
      %c0_16 = arith.constant 0 : index
      %31 = vector.load %arg5[%c0_15, %c0_16] : memref<1x128xf32, #tpu.memory_space<vmem>>, vector<1x128xf32>
      %32 = arith.mulf %30, %31 : vector<1x128xf32>
      %c0_17 = arith.constant 0 : index
      %c0_18 = arith.constant 0 : index
      %33 = vector.load %arg6[%c0_17, %c0_18] : memref<1x128xf32, #tpu.memory_space<vmem>>, vector<1x128xf32>
      %34 = arith.mulf %20, %32 : vector<1x128xf32>
      %35 = arith.subf %33, %34 : vector<1x128xf32>
      %36 = vector.broadcast %32 : vector<1x128xf32> to vector<128x128xf32>
      %37 = arith.mulf %16, %36 : vector<128x128xf32>
      %38 = vector.broadcast %35 : vector<1x128xf32> to vector<128x128xf32>
      %39 = arith.addf %37, %38 : vector<128x128xf32>
      %cst_19 = arith.constant 0.000000e+00 : f32
      %40 = vector.broadcast %cst_19 : f32 to vector<128x128xf32>
      %41 = arith.maximumf %39, %40 : vector<128x128xf32>
      %c0_20 = arith.constant 0 : index
      %c0_21 = arith.constant 0 : index
      %42 = vector.load %arg7[%c0_20, %c0_21] : memref<128x128xf32, #tpu.memory_space<vmem>>, vector<128x128xf32>
      tpu.vector_store %arg7[%c0_20, %c0_21], %41 {strides = array<i32>} : memref<128x128xf32, #tpu.memory_space<vmem>>, vector<128x128xf32>,
    } else {
    }
    return
  }
  func.func @transform_0(%arg0: i32, %arg1: i32, %arg2: i32) -> (i32, i32) {
    %c0_i32 = arith.constant 0 : i32
    return %arg1, %arg2 : i32, i32
  }
  func.func @transform_1(%arg0: i32, %arg1: i32, %arg2: i32) -> (i32, i32) {
    %c0_i32 = arith.constant 0 : i32
    return %arg2, %arg0 : i32, i32
  }
  func.func @transform_2(%arg0: i32, %arg1: i32, %arg2: i32) -> (i32, i32) {
    %c0_i32 = arith.constant 0 : i32
    %c0_i32_0 = arith.constant 0 : i32
    return %c0_i32, %arg0 : i32, i32
  }
  func.func @transform_3(%arg0: i32, %arg1: i32, %arg2: i32) -> (i32, i32) {
    %c0_i32 = arith.constant 0 : i32
    %c0_i32_0 = arith.constant 0 : i32
    return %c0_i32, %arg0 : i32, i32
  }
  func.func @transform_4(%arg0: i32, %arg1: i32, %arg2: i32) -> (i32, i32) {
    %c0_i32 = arith.constant 0 : i32
    %c0_i32_0 = arith.constant 0 : i32
    return %c0_i32, %arg0 : i32, i32
  }
}

</mosaic_0001>

<llo_original>
// kernel: tpu_custom_call.1
$region0: #{tpu_custom_call.1}
  #allocation0 [shape = 'u32[]', space=smem, size = 0x4, offset = 0x4, fixed_abs, tag = 'smem constant byte address 0x4 - core index']
  #allocation1 [shape = 'u32[72,128]{1,0:T(1,128)}', space=vmem, size = 0x9000, scoped, tag = 'internal scratch']
  %s0 = inlined_call_operand.vmem [shape: bf16[128,64], index: 0, kind: input, shape index: {}]
  %s1 = inlined_call_operand.vmem [shape: bf16[64,128], index: 1, kind: input, shape index: {}]
  %s2 = inlined_call_operand.vmem [shape: f32[1,128], index: 2, kind: input, shape index: {}]
  %s3 = inlined_call_operand.vmem [shape: f32[1,128], index: 3, kind: input, shape index: {}]
  %s4 = inlined_call_operand.hbm [shape: f32[128,128], index: 4, kind: output, shape index: {}]
  %s5 = sld [smem:[#allocation0]]
  $region61: #{tpu_custom_call.1} parent=0
    _
  %s7 = ssub.s32 1, %s5
  %s8 = scalar_select 0, %s7, %s5
  $region1: #{tpu_custom_call.1} parent=0
    #allocation2 [shape = 'u8[65536]{0}', space=vmem, size = 0x10000, scoped, tag = 'output window, operand 0, single buffered']
    #allocation3 [shape = 's32[2]{0}', space=sflag, size = 0x8, scoped, tag = 'scoped memory for tpu_custom_call.1']
    %9 = vsyncpa [#allocation3], 0
    loop: start=0, step=1, limit=6
    $region2: #{tpu_custom_call.1} parent=1 // loop_pre_header
      _
    $region3: #{tpu_custom_call.1} parent=1 // loop_header
      %s11 = sphi 0, %s15
      %p12 = scmp.ge.s32.totalorder %s11, 6
      %s18 = sphi 0, %s37
      %s19 = sphi 0, %s33
      %s20 = sphi 0, %s29
      %s21 = sphi 0, %s18
      %s22 = sphi 0, %s19
      %s23 = sphi 0, %s20
      %s24 = sphi 0, %s21
      %s25 = sphi 0, %s22
      %s26 = sphi 0, %s23
      %s42 = sphi 0, %s44
      %s45 = sphi 0, %s42
      %s46 = sphi 0, %s45
      %s62 = sphi 0, %s46
      %s70 = sphi 0, %s72
      %s73 = sphi 0, %s70
      %s74 = sphi 0, %s73
      %s90 = sphi 0, %s74
      %s96 = sphi 0, %s98
      %s99 = sphi 0, %s96
      %s100 = sphi 0, %s99
      %s116 = sphi 0, %s100
      %s122 = sphi 0, %s124
      %s125 = sphi 0, %s122
      %s126 = sphi 0, %s125
      %s142 = sphi 0, %s126
      %s148 = sphi 0, %s150
      %s151 = sphi 0, %s148
      %s152 = sphi 0, %s151
      %s168 = sphi 0, %s152
    $region4: #{tpu_custom_call.1} parent=1 // loop_header_branch
      %14 = sbr.rel (%p12) target = $region8
    $region5: #{tpu_custom_call.1} parent=1 // loop_body
      %s16 = ssub.s32 %s11, 1
      %s17 = ssub.s32 %s11, 2
      %s27 = sadd.s32 1, %s20
      %p28 = scmp.ge.s32.totalorder %s27, 1
      %s29 = scalar_select %p28, 0, %s27
      %s30 = sadd.s32 1, %s19
      %s31 = scalar_select %p28, %s30, %s19
      %p32 = scmp.ge.s32.totalorder %s31, 4
      %s33 = scalar_select %p32, 0, %s31
      %s34 = sadd.s32 1, %s18
      %s35 = scalar_select %p32, %s34, %s18
      %p36 = scmp.ge.s32.totalorder %s35, 1
      %s37 = scalar_select %p36, 0, %s35
      %s38 = ssub.s32 %s19, %s33
      %s39 = ssub.s32 %s20, %s29
      %s40 = sor.u32 %s38, %s39
      %p41 = scmp.eq.s32.totalorder %s40, 0
      %s43 = sadd.s32 %s42, 1
      %s44 = scalar_select %p41, %s42, %s43
      %p47 = pneg %p41
      %p48 = scmp.eq.s32.totalorder %s11, 3
      %p49 = por %p47, %p48
      %p50 = scmp.ne.s32.totalorder %s42, %s45
      %p51 = scmp.eq.s32.totalorder %s11, 0
      %p52 = por %p50, %p51
      %p53 = scmp.ne.s32.totalorder %s42, %s45
      %p54 = scmp.eq.s32.totalorder %s16, 3
      %p55 = por %p53, %p54
      %p56 = scmp.ne.s32.totalorder %s45, %s46
      %p57 = scmp.eq.s32.totalorder %s16, 0
      %p58 = por %p56, %p57
      %p59 = scmp.ne.s32.totalorder %s45, %s46
      %p60 = scmp.eq.s32.totalorder %s17, 3
      %p61 = por %p59, %p60
      %p63 = scmp.ne.s32.totalorder %s46, %s62
      %p64 = scmp.eq.s32.totalorder %s17, 0
      %p65 = por %p63, %p64
      %s66 = ssub.s32 %s20, %s29
      %s67 = ssub.s32 %s18, %s37
      %s68 = sor.u32 %s66, %s67
      %p69 = scmp.eq.s32.totalorder %s68, 0
      %s71 = sadd.s32 %s70, 1
      %s72 = scalar_select %p69, %s70, %s71
      %p75 = pneg %p69
      %p76 = scmp.eq.s32.totalorder %s11, 3
      %p77 = por %p75, %p76
      %p78 = scmp.ne.s32.totalorder %s70, %s73
      %p79 = scmp.eq.s32.totalorder %s11, 0
      %p80 = por %p78, %p79
      %p81 = scmp.ne.s32.totalorder %s70, %s73
      %p82 = scmp.eq.s32.totalorder %s16, 3
      %p83 = por %p81, %p82
      %p84 = scmp.ne.s32.totalorder %s73, %s74
      %p85 = scmp.eq.s32.totalorder %s16, 0
      %p86 = por %p84, %p85
      %p87 = scmp.ne.s32.totalorder %s73, %s74
      %p88 = scmp.eq.s32.totalorder %s17, 3
      %p89 = por %p87, %p88
      %p91 = scmp.ne.s32.totalorder %s74, %s90
      %p92 = scmp.eq.s32.totalorder %s17, 0
      %p93 = por %p91, %p92
      %s94 = ssub.s32 %s18, %s37
      %p95 = scmp.eq.s32.totalorder %s94, 0
      %s97 = sadd.s32 %s96, 1
      %s98 = scalar_select %p95, %s96, %s97
      %p101 = pneg %p95
      %p102 = scmp.eq.s32.totalorder %s11, 3
      %p103 = por %p101, %p102
      %p104 = scmp.ne.s32.totalorder %s96, %s99
      %p105 = scmp.eq.s32.totalorder %s11, 0
      %p106 = por %p104, %p105
      %p107 = scmp.ne.s32.totalorder %s96, %s99
      %p108 = scmp.eq.s32.totalorder %s16, 3
      %p109 = por %p107, %p108
      %p110 = scmp.ne.s32.totalorder %s99, %s100
      %p111 = scmp.eq.s32.totalorder %s16, 0
      %p112 = por %p110, %p111
      %p113 = scmp.ne.s32.totalorder %s99, %s100
      %p114 = scmp.eq.s32.totalorder %s17, 3
      %p115 = por %p113, %p114
      %p117 = scmp.ne.s32.totalorder %s100, %s116
      %p118 = scmp.eq.s32.totalorder %s17, 0
      %p119 = por %p117, %p118
      %s120 = ssub.s32 %s18, %s37
      %p121 = scmp.eq.s32.totalorder %s120, 0
      %s123 = sadd.s32 %s122, 1
      %s124 = scalar_select %p121, %s122, %s123
      %p127 = pneg %p121
      %p128 = scmp.eq.s32.totalorder %s11, 3
      %p129 = por %p127, %p128
      %p130 = scmp.ne.s32.totalorder %s122, %s125
      %p131 = scmp.eq.s32.totalorder %s11, 0
      %p132 = por %p130, %p131
      %p133 = scmp.ne.s32.totalorder %s122, %s125
      %p134 = scmp.eq.s32.totalorder %s16, 3
      %p135 = por %p133, %p134
      %p136 = scmp.ne.s32.totalorder %s125, %s126
      %p137 = scmp.eq.s32.totalorder %s16, 0
      %p138 = por %p136, %p137
      %p139 = scmp.ne.s32.totalorder %s125, %s126
      %p140 = scmp.eq.s32.totalorder %s17, 3
      %p141 = por %p139, %p140
      %p143 = scmp.ne.s32.totalorder %s126, %s142
      %p144 = scmp.eq.s32.totalorder %s17, 0
      %p145 = por %p143, %p144
      %s146 = ssub.s32 %s18, %s37
      %p147 = scmp.eq.s32.totalorder %s146, 0
      %s149 = sadd.s32 %s148, 1
      %s150 = scalar_select %p147, %s148, %s149
      %p153 = pneg %p147
      %p154 = scmp.eq.s32.totalorder %s11, 3
      %p155 = por %p153, %p154
      %p156 = scmp.ne.s32.totalorder %s148, %s151
      %p157 = scmp.eq.s32.totalorder %s11, 0
      %p158 = por %p156, %p157
      %p159 = scmp.ne.s32.totalorder %s148, %s151
      %p160 = scmp.eq.s32.totalorder %s16, 3
      %p161 = por %p159, %p160
      %p162 = scmp.ne.s32.totalorder %s151, %s152
      %p163 = scmp.eq.s32.totalorder %s16, 0
      %p164 = por %p162, %p163
      %p165 = scmp.ne.s32.totalorder %s151, %s152
      %p166 = scmp.eq.s32.totalorder %s17, 3
      %p167 = por %p165, %p166
      %p169 = scmp.ne.s32.totalorder %s152, %s168
      %p170 = scmp.eq.s32.totalorder %s17, 0
      %p171 = por %p169, %p170
      %p172 = scmp.le.s32.totalorder 1, %s11
      %p173 = scmp.lt.s32.totalorder %s11, 5
      %p174 = pnand %p172, %p173
      %p175 = pneg %p174
      // Predicated region
      $region9: #{tpu_custom_call.1} parent=5 // pred_check
        _
      $region10: #{tpu_custom_call.1} parent=5 // pred_check_branch
        %177 = sbr.rel (%p174) target = $region12
      $region11: #{tpu_custom_call.1} parent=5 // pred_region
        %s178 = ssub.s32 %s11, 1
        // Predicated region
        $region13: #{tpu_custom_call.1} parent=11 // pred_check
          %p179 = pneg %p86
        $region14: #{tpu_custom_call.1} parent=11 // pred_check_branch
          %181 = sbr.rel (%p179) target = $region16
        $region15: #{tpu_custom_call.1} parent=11 // pred_region
          %s182 = smul.u32 8, %s23
          %p183 = scmp.lt.s32.totalorder %s182, 7
          %s184 = scalar_select %p183, %s182, 7
          %p185 = scmp.lt.s32.totalorder %s21, 0
          %s186 = scalar_select %p185, %s21, 0
          %s187 = sadd.s32 %s186, %s184
          %s188 = smul.addr %s187, 4
          %s189 = scalar_lea.vmem %s1, %s188
          %s190 = smul.u32 8, %s23
        $region16: #{tpu_custom_call.1} parent=11 // pred_fallthru
          _
        // Predicated region
        $region17: #{tpu_custom_call.1} parent=11 // pred_check
          %p191 = pneg %p112
        $region18: #{tpu_custom_call.1} parent=11 // pred_check_branch
          %193 = sbr.rel (%p191) target = $region20
        $region19: #{tpu_custom_call.1} parent=11 // pred_region
          %p194 = scmp.lt.s32.totalorder %s21, 0
          %s195 = scalar_select %p194, %s21, 0
          %s196 = scalar_lea.vmem %s2, %s195
        $region20: #{tpu_custom_call.1} parent=11 // pred_fallthru
          _
        // Predicated region
        $region21: #{tpu_custom_call.1} parent=11 // pred_check
          %p197 = pneg %p138
        $region22: #{tpu_custom_call.1} parent=11 // pred_check_branch
          %199 = sbr.rel (%p197) target = $region24
        $region23: #{tpu_custom_call.1} parent=11 // pred_region
          %p200 = scmp.lt.s32.totalorder %s21, 0
          %s201 = scalar_select %p200, %s21, 0
          %s202 = scalar_lea.vmem %s3, %s201
        $region24: #{tpu_custom_call.1} parent=11 // pred_fallthru
          _
      $region12: #{tpu_custom_call.1} parent=5 // pred_fallthru
        _
      %p203 = scmp.lt.s32.totalorder %s11, 4
      // Predicated region
      $region25: #{tpu_custom_call.1} parent=5 // pred_check
        %p204 = pneg %p203
      $region26: #{tpu_custom_call.1} parent=5 // pred_check_branch
        %206 = sbr.rel (%p204) target = $region28
      $region27: #{tpu_custom_call.1} parent=5 // pred_region
        // Predicated region
        $region29: #{tpu_custom_call.1} parent=27 // pred_check
          %p207 = pneg %p52
        $region30: #{tpu_custom_call.1} parent=27 // pred_check_branch
          %209 = sbr.rel (%p207) target = $region32
        $region31: #{tpu_custom_call.1} parent=27 // pred_region
          %s210 = smul.u32 4, %s19
          %p211 = scmp.lt.s32.totalorder %s210, 15
          %s212 = scalar_select %p211, %s210, 15
          %p213 = scmp.lt.s32.totalorder %s20, 0
          %s214 = scalar_select %p213, %s20, 0
          %s215 = sadd.s32 %s214, %s212
          %s216 = smul.addr %s215, 4
          %s217 = scalar_lea.vmem %s0, %s216
          %s218 = smul.u32 4, %s19
        $region32: #{tpu_custom_call.1} parent=27 // pred_fallthru
          _
      $region28: #{tpu_custom_call.1} parent=5 // pred_fallthru
        _
      %p219 = scmp.le.s32.totalorder 1, %s11
      %p220 = scmp.lt.s32.totalorder %s11, 5
      %p221 = pnand %p219, %p220
      %p222 = pneg %p221
      // Predicated region
      $region33: #{tpu_custom_call.1} parent=5 // pred_check
        _
      $region34: #{tpu_custom_call.1} parent=5 // pred_check_branch
        %224 = sbr.rel (%p221) target = $region36
      $region35: #{tpu_custom_call.1} parent=5 // pred_region
        %s225 = ssub.s32 %s11, 1
        %s226 = smul.u32 4, %s22
        %p227 = scmp.lt.s32.totalorder %s226, 15
        %s228 = scalar_select %p227, %s226, 15
        %p229 = scmp.lt.s32.totalorder %s23, 0
        %s230 = scalar_select %p229, %s23, 0
        %s231 = sadd.s32 %s230, %s228
        %s232 = smul.addr %s231, 4
        %s233 = scalar_lea.vmem %s0, %s232
        %p234 = pneg %p58
        %p235 = pneg %p55
        %s236 = smul.u32 8, %s23
        %p237 = scmp.lt.s32.totalorder %s236, 7
        %s238 = scalar_select %p237, %s236, 7
        %p239 = scmp.lt.s32.totalorder %s21, 0
        %s240 = scalar_select %p239, %s21, 0
        %s241 = sadd.s32 %s240, %s238
        %s242 = smul.addr %s241, 4
        %s243 = scalar_lea.vmem %s1, %s242
        %p244 = pneg %p86
        %p245 = pneg %p83
        %p246 = scmp.lt.s32.totalorder %s21, 0
        %s247 = scalar_select %p246, %s21, 0
        %s248 = scalar_lea.vmem %s2, %s247
        %p249 = pneg %p112
        %p250 = pneg %p109
        %p251 = scmp.lt.s32.totalorder %s21, 0
        %s252 = scalar_select %p251, %s21, 0
        %s253 = scalar_lea.vmem %s3, %s252
        %p254 = pneg %p138
        %p255 = pneg %p135
        %p256 = pneg %p164
        %p257 = pneg %p161
        %s258 = smul.u32 4, %s22
        %p259 = scmp.lt.s32.totalorder %s258, 15
        %s260 = scalar_select %p259, %s258, 15
        %p261 = scmp.lt.s32.totalorder %s23, 0
        %s262 = scalar_select %p261, %s23, 0
        %s263 = sadd.s32 %s262, %s260
        %s264 = smul.addr %s263, 4
        %s265 = scalar_lea.vmem %s0, %s264
        %s266 = smul.u32 4, %s22
        %s267 = smul.u32 8, %s23
        %p268 = scmp.lt.s32.totalorder %s267, 7
        %s269 = scalar_select %p268, %s267, 7
        %p270 = scmp.lt.s32.totalorder %s21, 0
        %s271 = scalar_select %p270, %s21, 0
        %s272 = sadd.s32 %s271, %s269
        %s273 = smul.addr %s272, 4
        %s274 = scalar_lea.vmem %s1, %s273
        %s275 = smul.u32 8, %s23
        %p276 = scmp.lt.s32.totalorder %s21, 0
        %s277 = scalar_select %p276, %s21, 0
        %s278 = scalar_lea.vmem %s2, %s277
        %p279 = scmp.lt.s32.totalorder %s21, 0
        %s280 = scalar_select %p279, %s21, 0
        %s281 = scalar_lea.vmem %s3, %s280
        %v283 = vld [vmem:[%s265] sm:$0xf]
        %v284 = vld [vmem:[%s265 + $0x4] sm:$0xf]
        %v285 = vld [vmem:[%s265 + $0x8] sm:$0xf]
        %v286 = vld [vmem:[%s265 + $0xc] sm:$0xf]
        %v287 = vld [vmem:[%s274] sm:$0xf]
        %v288 = vld [vmem:[%s274 + $0x4] sm:$0xf]
        %v289 = vld [vmem:[%s274 + $0x8] sm:$0xf]
        %v290 = vld [vmem:[%s274 + $0xc] sm:$0xf]
        %v291 = vld [vmem:[%s274 + $0x10] sm:$0xf]
        %v292 = vld [vmem:[%s274 + $0x14] sm:$0xf]
        %v293 = vld [vmem:[%s274 + $0x18] sm:$0xf]
        %v294 = vld [vmem:[%s274 + $0x1c] sm:$0xf]
        %v299 = vunpack.c.l.b16 %v283
        %v300 = vunpack.c.l.b16 %v284
        %v301 = vunpack.c.l.b16 %v285
        %v302 = vunpack.c.l.b16 %v286
        %v303 = vpack.c.b16 %v300, %v299
        %v304 = vpack.c.b16 %v302, %v301
        %v313 = vunpack.c.l.b16 %v287
        %v314 = vunpack.c.l.b16 %v288
        %v315 = vunpack.c.l.b16 %v289
        %v316 = vunpack.c.l.b16 %v290
        %v317 = vunpack.c.l.b16 %v291
        %v318 = vunpack.c.l.b16 %v292
        %v319 = vunpack.c.l.b16 %v293
        %v320 = vunpack.c.l.b16 %v294
        %v321 = vpack.c.b16 %v314, %v313
        %v322 = vpack.c.b16 %v316, %v315
        %v323 = vpack.c.b16 %v318, %v317
        %v324 = vpack.c.b16 %v320, %v319
        %vm329 = vcmask 523264
        %v331 = vsel %vm329, %v303, 0
        %v334 = vsel %vm329, %v304, 0
        %336 = vmatpush.bf16.msra.mxu0 0
        %337 = vmatpush.bf16.msra.mxu0 0
        %338 = vmatpush.bf16.msra.mxu0 0
        %339 = vmatpush.bf16.msra.mxu0 0
        %340 = vmatpush.bf16.msra.mxu0 %v324
        %341 = vmatpush.bf16.msra.mxu0 %v323
        %342 = vmatpush.bf16.msra.mxu0 %v322
        %343 = vmatpush.bf16.msra.mxu0 %v321
        %344 = vmatmul.bf16.gmra.mxu0 %v331
        %v345 = vpop.f32.mrf.mxu0
        %v346 = vadd.f32 0.0, %v345
        %v347 = vpop.f32.mrf.mxu0
        %v348 = vadd.f32 0.0, %v347
        %349 = vmatmul.bf16.gmra.mxu0 %v334
        %v350 = vpop.f32.mrf.mxu0
        %v351 = vadd.f32 0.0, %v350
        %v352 = vpop.f32.mrf.mxu0
        %v353 = vadd.f32 0.0, %v352
        %354 = vdwg.mxu0
        %s355 = smul.u32 %s22, 32
        %p356 = scmp.eq.s32.totalorder %s23, 0
        // Predicated region
        $region37: #{tpu_custom_call.1} parent=35 // pred_check
          %p357 = pneg %p356
        $region38: #{tpu_custom_call.1} parent=35 // pred_check_branch
          %359 = sbr.rel (%p357) target = $region40
        $region39: #{tpu_custom_call.1} parent=35 // pred_region
          %s360 = scalar_lea.vmem [#allocation2], %s355
          %361 = vst [vmem:[%s360] sm:$0xff] %v346
          %362 = vst [vmem:[%s360 + $0x8] sm:$0xff] %v348
          %363 = vst [vmem:[%s360 + $0x10] sm:$0xff] %v351
          %364 = vst [vmem:[%s360 + $0x18] sm:$0xff] %v353
        $region40: #{tpu_custom_call.1} parent=35 // pred_fallthru
          _
        %p365 = scmp.ne.s32.totalorder %s23, 0
        // Predicated region
        $region41: #{tpu_custom_call.1} parent=35 // pred_check
          %p366 = pneg %p365
        $region42: #{tpu_custom_call.1} parent=35 // pred_check_branch
          %368 = sbr.rel (%p366) target = $region44
        $region43: #{tpu_custom_call.1} parent=35 // pred_region
          %s369 = scalar_lea.vmem [#allocation2], %s355
          %v370 = vld [vmem:[%s369] sm:$0xff]
          %v371 = vld [vmem:[%s369 + $0x8] sm:$0xff]
          %v372 = vld [vmem:[%s369 + $0x10] sm:$0xff]
          %v373 = vld [vmem:[%s369 + $0x18] sm:$0xff]
          %v374 = vadd.f32 %v370, %v346
          %v375 = vadd.f32 %v371, %v348
          %v376 = vadd.f32 %v372, %v351
          %v377 = vadd.f32 %v373, %v353
          %378 = vst [vmem:[%s369] sm:$0xff] %v374
          %379 = vst [vmem:[%s369 + $0x8] sm:$0xff] %v375
          %380 = vst [vmem:[%s369 + $0x10] sm:$0xff] %v376
          %381 = vst [vmem:[%s369 + $0x18] sm:$0xff] %v377
        $region44: #{tpu_custom_call.1} parent=35 // pred_fallthru
          _
        %p382 = scmp.eq.s32.totalorder %s22, 3
        %p383 = pnand %p382, %p356
        %p384 = pneg %p383
        // Predicated region
        $region45: #{tpu_custom_call.1} parent=35 // pred_check
          _
        $region46: #{tpu_custom_call.1} parent=35 // pred_check_branch
          %386 = sbr.rel (%p383) target = $region48
        $region47: #{tpu_custom_call.1} parent=35 // pred_region
          %v387 = vld [vmem:[#allocation2] sm:$0xff]
          %v388 = vld [vmem:[#allocation2 + $0x8] sm:$0xff]
          %v389 = vld [vmem:[#allocation2 + $0x10] sm:$0xff]
          %v390 = vld [vmem:[#allocation2 + $0x18] sm:$0xff]
          %v391 = vld [vmem:[#allocation2 + $0x20] sm:$0xff]
          %v392 = vld [vmem:[#allocation2 + $0x28] sm:$0xff]
          %v393 = vld [vmem:[#allocation2 + $0x30] sm:$0xff]
          %v394 = vld [vmem:[#allocation2 + $0x38] sm:$0xff]
          %v395 = vld [vmem:[#allocation2 + $0x40] sm:$0xff]
          %v396 = vld [vmem:[#allocation2 + $0x48] sm:$0xff]
          %v397 = vld [vmem:[#allocation2 + $0x50] sm:$0xff]
          %v398 = vld [vmem:[#allocation2 + $0x58] sm:$0xff]
          %v399 = vld [vmem:[#allocation2 + $0x60] sm:$0xff]
          %v400 = vld [vmem:[#allocation2 + $0x68] sm:$0xff]
          %v401 = vld [vmem:[#allocation2 + $0x70] sm:$0xff]
          %v402 = vld [vmem:[#allocation2 + $0x78] sm:$0xff]
          %v403 = vadd.f32 %v387, %v388
          %v404 = vadd.f32 %v403, %v389
          %v405 = vadd.f32 %v404, %v390
          %v406 = vadd.f32 %v405, %v391
          %v407 = vadd.f32 %v406, %v392
          %v408 = vadd.f32 %v407, %v393
          %v409 = vadd.f32 %v408, %v394
          %v410 = vadd.f32 %v409, %v395
          %v411 = vadd.f32 %v410, %v396
          %v412 = vadd.f32 %v411, %v397
          %v413 = vadd.f32 %v412, %v398
          %v414 = vadd.f32 %v413, %v399
          %v415 = vadd.f32 %v414, %v400
          %v416 = vadd.f32 %v415, %v401
          %v417 = vadd.f32 %v416, %v402
          %v418 = vrot.slane %v417, 4
          %v419 = vadd.f32 %v417, %v418
          %v420 = vrot.slane %v419, 2
          %v421 = vadd.f32 %v419, %v420
          %v422 = vrot.slane %v421, 1
          %v423 = vadd.f32 %v421, %v422
          %v424 = vrcp.pop 128.0
          %v425 = vmul.f32 128.0, %v424
          %v426 = vsub.f32 1.0, %v425
          %v427 = vmul.f32 %v424, %v426
          %v428 = vadd.f32 %v424, %v427
          %vm429 = vweird.f32 %v424
          %v430 = vsel %vm429, %v424, %v428
          %v431 = vmul.f32 %v423, %v430
          %v432 = vsub.f32 %v387, %v431
          %v433 = vsub.f32 %v388, %v431
          %v434 = vsub.f32 %v389, %v431
          %v435 = vsub.f32 %v390, %v431
          %v436 = vsub.f32 %v391, %v431
          %v437 = vsub.f32 %v392, %v431
          %v438 = vsub.f32 %v393, %v431
          %v439 = vsub.f32 %v394, %v431
          %v440 = vsub.f32 %v395, %v431
          %v441 = vsub.f32 %v396, %v431
          %v442 = vsub.f32 %v397, %v431
          %v443 = vsub.f32 %v398, %v431
          %v444 = vsub.f32 %v399, %v431
          %v445 = vsub.f32 %v400, %v431
          %v446 = vsub.f32 %v401, %v431
          %v447 = vsub.f32 %v402, %v431
          %v448 = vmul.f32 %v432, %v432
          %v449 = vmul.f32 %v433, %v433
          %v450 = vmul.f32 %v434, %v434
          %v451 = vmul.f32 %v435, %v435
          %v452 = vmul.f32 %v436, %v436
          %v453 = vmul.f32 %v437, %v437
          %v454 = vmul.f32 %v438, %v438
          %v455 = vmul.f32 %v439, %v439
          %v456 = vmul.f32 %v440, %v440
          %v457 = vmul.f32 %v441, %v441
          %v458 = vmul.f32 %v442, %v442
          %v459 = vmul.f32 %v443, %v443
          %v460 = vmul.f32 %v444, %v444
          %v461 = vmul.f32 %v445, %v445
          %v462 = vmul.f32 %v446, %v446
          %v463 = vmul.f32 %v447, %v447
          %v464 = vadd.f32 %v448, %v449
          %v465 = vadd.f32 %v464, %v450
          %v466 = vadd.f32 %v465, %v451
          %v467 = vadd.f32 %v466, %v452
          %v468 = vadd.f32 %v467, %v453
          %v469 = vadd.f32 %v468, %v454
          %v470 = vadd.f32 %v469, %v455
          %v471 = vadd.f32 %v470, %v456
          %v472 = vadd.f32 %v471, %v457
          %v473 = vadd.f32 %v472, %v458
          %v474 = vadd.f32 %v473, %v459
          %v475 = vadd.f32 %v474, %v460
          %v476 = vadd.f32 %v475, %v461
          %v477 = vadd.f32 %v476, %v462
          %v478 = vadd.f32 %v477, %v463
          %v479 = vrot.slane %v478, 4
          %v480 = vadd.f32 %v478, %v479
          %v481 = vrot.slane %v480, 2
          %v482 = vadd.f32 %v480, %v481
          %v483 = vrot.slane %v482, 1
          %v484 = vadd.f32 %v482, %v483
          %v485 = vmul.f32 %v484, %v430
          %v486 = vadd.f32 %v485, 1e-05
          %v487 = vrsqrt.pop %v486
          %v488 = vmul.f32 %v487, %v486
          %v489 = vmul.f32 %v488, %v487
          %v490 = vmul.f32 0.5, %v489
          %v491 = vsub.f32 1.5, %v490
          %v492 = vmul.f32 %v487, %v491
          %vm493 = vweird.f32 %v486
          %vm494 = vweird.f32 %v487
          %vm495 = vmor %vm493, %vm494
          %v496 = vsel %vm495, %v487, %v492
          %v497 = vld [vmem:[%s278] sm:$0x1]
          %v498 = vmul.f32 %v496, %v497
          %v499 = vld [vmem:[%s281] sm:$0x1]
          %v500 = vmul.f32 %v431, %v498
          %v501 = vsub.f32 %v499, %v500
          %v502 = vperm.slane %v498, 0
          %v503 = vmul.f32 %v387, %v502
          %v504 = vmul.f32 %v388, %v502
          %v505 = vmul.f32 %v389, %v502
          %v506 = vmul.f32 %v390, %v502
          %v507 = vmul.f32 %v391, %v502
          %v508 = vmul.f32 %v392, %v502
          %v509 = vmul.f32 %v393, %v502
          %v510 = vmul.f32 %v394, %v502
          %v511 = vmul.f32 %v395, %v502
          %v512 = vmul.f32 %v396, %v502
          %v513 = vmul.f32 %v397, %v502
          %v514 = vmul.f32 %v398, %v502
          %v515 = vmul.f32 %v399, %v502
          %v516 = vmul.f32 %v400, %v502
          %v517 = vmul.f32 %v401, %v502
          %v518 = vmul.f32 %v402, %v502
          %v520 = vperm.slane %v501, 0
          %v522 = vadd.f32 %v503, %v520
          %v523 = vadd.f32 %v504, %v520
          %v524 = vadd.f32 %v505, %v520
          %v525 = vadd.f32 %v506, %v520
          %v526 = vadd.f32 %v507, %v520
          %v527 = vadd.f32 %v508, %v520
          %v528 = vadd.f32 %v509, %v520
          %v529 = vadd.f32 %v510, %v520
          %v530 = vadd.f32 %v511, %v520
          %v531 = vadd.f32 %v512, %v520
          %v532 = vadd.f32 %v513, %v520
          %v533 = vadd.f32 %v514, %v520
          %v534 = vadd.f32 %v515, %v520
          %v535 = vadd.f32 %v516, %v520
          %v536 = vadd.f32 %v517, %v520
          %v537 = vadd.f32 %v518, %v520
          %v538 = vmax.f32 %v522, 0.0
          %v539 = vmax.f32 %v523, 0.0
          %v540 = vmax.f32 %v524, 0.0
          %v541 = vmax.f32 %v525, 0.0
          %v542 = vmax.f32 %v526, 0.0
          %v543 = vmax.f32 %v527, 0.0
          %v544 = vmax.f32 %v528, 0.0
          %v545 = vmax.f32 %v529, 0.0
          %v546 = vmax.f32 %v530, 0.0
          %v547 = vmax.f32 %v531, 0.0
          %v548 = vmax.f32 %v532, 0.0
          %v549 = vmax.f32 %v533, 0.0
          %v550 = vmax.f32 %v534, 0.0
          %v551 = vmax.f32 %v535, 0.0
          %v552 = vmax.f32 %v536, 0.0
          %v553 = vmax.f32 %v537, 0.0
          %554 = vst [vmem:[#allocation2] sm:$0xff] %v538
          %555 = vst [vmem:[#allocation2 + $0x8] sm:$0xff] %v539
          %556 = vst [vmem:[#allocation2 + $0x10] sm:$0xff] %v540
          %557 = vst [vmem:[#allocation2 + $0x18] sm:$0xff] %v541
          %558 = vst [vmem:[#allocation2 + $0x20] sm:$0xff] %v542
          %559 = vst [vmem:[#allocation2 + $0x28] sm:$0xff] %v543
          %560 = vst [vmem:[#allocation2 + $0x30] sm:$0xff] %v544
          %561 = vst [vmem:[#allocation2 + $0x38] sm:$0xff] %v545
          %562 = vst [vmem:[#allocation2 + $0x40] sm:$0xff] %v546
          %563 = vst [vmem:[#allocation2 + $0x48] sm:$0xff] %v547
          %564 = vst [vmem:[#allocation2 + $0x50] sm:$0xff] %v548
          %565 = vst [vmem:[#allocation2 + $0x58] sm:$0xff] %v549
          %566 = vst [vmem:[#allocation2 + $0x60] sm:$0xff] %v550
          %567 = vst [vmem:[#allocation2 + $0x68] sm:$0xff] %v551
          %568 = vst [vmem:[#allocation2 + $0x70] sm:$0xff] %v552
          %569 = vst [vmem:[#allocation2 + $0x78] sm:$0xff] %v553
        $region48: #{tpu_custom_call.1} parent=35 // pred_fallthru
          _
        // Predicated region
        $region49: #{tpu_custom_call.1} parent=35 // pred_check
          %p570 = pneg %p161
        $region50: #{tpu_custom_call.1} parent=35 // pred_check_branch
          %572 = sbr.rel (%p570) target = $region52
        $region51: #{tpu_custom_call.1} parent=35 // pred_region
          %574 = vsyncadd [#allocation3], 0
          %s575 = smul.addr %s21, 8
          %s576 = scalar_lea.hbm %s4, %s575
          %s577 = sshll.u32 [#allocation2], 4
          %s578 = int_to_ptr.vmem [resolvable:$true] %s577
          %s579 = sshll.u32 %s576, 4
          %s580 = int_to_ptr.hbm [resolvable:$true] %s579
          %585 = dma.vmem_to_hbm [thread:$0]  %s578, 2048, %s580, [#allocation3], 128, 128, 8
        $region52: #{tpu_custom_call.1} parent=35 // pred_fallthru
          _
        // Predicated region
        $region53: #{tpu_custom_call.1} parent=35 // pred_check
          %p586 = pneg %p161
        $region54: #{tpu_custom_call.1} parent=35 // pred_check_branch
          %588 = sbr.rel (%p586) target = $region56
        $region55: #{tpu_custom_call.1} parent=35 // pred_region
          %590 = dma.done [#allocation3], 2048
        $region56: #{tpu_custom_call.1} parent=35 // pred_fallthru
          _
      $region36: #{tpu_custom_call.1} parent=5 // pred_fallthru
        _
      %p591 = scmp.le.s32.totalorder 2, %s11
      // Predicated region
      $region57: #{tpu_custom_call.1} parent=5 // pred_check
        %p592 = pneg %p591
      $region58: #{tpu_custom_call.1} parent=5 // pred_check_branch
        %594 = sbr.rel (%p592) target = $region60
      $region59: #{tpu_custom_call.1} parent=5 // pred_region
        %s595 = ssub.s32 %s11, 2
      $region60: #{tpu_custom_call.1} parent=5 // pred_fallthru
        _
    $region6: #{tpu_custom_call.1} parent=1 // loop_footer
      %s15 = sadd.s32 1, %s11
    $region7: #{tpu_custom_call.1} parent=1 // loop_footer_branch
      %10 = sbr.rel target = $region3
    $region8: #{tpu_custom_call.1} parent=1 // loop_exit
      _
    %596 = vsyncpa [#allocation3], 1
    %s597 = scalar_lea.sflag [#allocation3], 1
    %598 = vsyncpa %s597, 1

</llo_original>
